<compile_context>
chip_gen: v5e
topology: v5e:2x2
jax: 0.10.0
libtpu: 0.0.40
codegen_flags: <defaults>
</compile_context>

<pallas_src>
import functools
import math

import jax
import jax.numpy as jnp
from jax.experimental import pallas as pl
from jax.experimental.pallas import tpu as pltpu


# (pos, neg1, neg2) diagonal-group index per anchor group, replicating the
# module exactly -- including the logits3_2 quirk (group 2 uses clip3[1] for
# its first "negative", i.e. the positive itself).
_PERM = ((0, 1, 3), (1, 0, 2), (2, 2, 3), (3, 0, 2))


def _cdiv(a, b):
    return -(-a // b)


def _nce_vsc_kernel(scale_ref, anchors_ref, diags_ref, out_ref, *,
                    block_rows, tiles_per_core, batch):
    """Fused diagonal-logit + 3-way cross-entropy over one row tile.

    anchors_ref / diags_ref: (4, block_rows, D_pad) blocks holding all four
    groups of the same row range.  out_ref: (1, block_rows, 1) per-core
    partial sums of (logsumexp([pos, n1, n2]) - pos), accumulated across the
    "arbitrary" tile axis; the wrapper sums the per-core blocks and divides
    by B.
    """
    core = pl.program_id(0)
    tile = pl.program_id(1)

    @pl.when(tile == 0)
    def _():
        out_ref[...] = jnp.zeros_like(out_ref)

    scale = scale_ref[0]  # exp(temp), computed once in the wrapper.

    # Mask rows that are padding (batch was padded up to a tile multiple).
    base = (core * tiles_per_core + tile) * block_rows
    row_ids = base + jax.lax.broadcasted_iota(jnp.int32, (block_rows, 1), 0)
    valid = row_ids < batch

    acc = jnp.zeros((block_rows, 1), jnp.float32)
    for g, pair in enumerate(_PERM):
        # The anchor slab is reused up to three times -> upcast once; diagonal
        # slabs are cast inline inside each row-dot (short f32 live ranges).
        a = anchors_ref[g].astype(jnp.float32)
        dots = {}
        for di in pair:
            if di not in dots:
                prod = a * diags_ref[di].astype(jnp.float32)
                dots[di] = scale * jnp.sum(prod, axis=-1, keepdims=True)
        pos, n1, n2 = (dots[di] for di in pair)
        # Single merged, max-stabilized 3-way log-sum-exp / cross-entropy
        # (the label is always the "pos" column).
        m = jnp.maximum(jnp.maximum(pos, n1), n2)
        lse = m + jnp.log(jnp.exp(pos - m) + jnp.exp(n1 - m) + jnp.exp(n2 - m))
        acc = acc + jnp.where(valid, lse - pos, 0.0)

    out_ref[0] += acc


def nce_learnable_temp_loss_vsc(temp, clip1, clip2, clip3, clip4,
                                *, vmem_budget_bytes=12 << 20):
    """temp: scalar parameter; clipN = (aN (B, D), cN (B, B, D)). Scalar loss."""
    a_list = [clip1[0], clip2[0], clip3[0], clip4[0]]
    c_list = [clip1[1], clip2[1], clip3[1], clip4[1]]
    B, D = a_list[0].shape
    for c in c_list:
        assert c.shape == (B, B, D), (
            "eye(B)-mask diagonal indexing in the module requires clip[1] of "
            f"shape (B, B, D); got {c.shape}")

    # ---- layout plumbing only (gather + stack + pad, zero arithmetic) ------
    # Only the diagonal c[b, b, :] of each (B, B, D) tensor is ever consumed.
    # TODO(synk): for very large D the diagonal gather could itself become a
    # per-row DMA inside the kernel (memory_space=pl.ANY) to save one 4*B*D
    # HBM write+read pass; the XLA gather is kept for small/medium D.
    idx = jnp.arange(B)
    anchors = jnp.stack(a_list)                                  # (4, B, D)
    diags = jnp.stack([c[idx, idx, :] for c in c_list])          # (4, B, D)
    itemsize = max(anchors.dtype.itemsize, diags.dtype.itemsize)

    # ---- VMEM-budgeted tile size -------------------------------------------
    d_pad = _cdiv(D, 128) * 128
    sub = max(8, 32 // itemsize)            # sublane multiple (f32:8, bf16:16)
    # Per tile row: 2 arrays * 4 groups * 2 pipeline buffers in input dtype,
    # plus ~f32 temporaries inside the body.
    per_row = 16 * d_pad * itemsize + 32 * d_pad
    max_rows = max(sub, (vmem_budget_bytes // per_row) // sub * sub)
    max_rows = min(max_rows, 1024)
    need = _cdiv(_cdiv(B, 2), sub) * sub    # rows per core before tiling
    block_rows = int(min(max_rows, need))

    tiles_per_core = int(_cdiv(B, 2 * block_rows))
    b_pad = 2 * tiles_per_core * block_rows

    if b_pad != B or d_pad != D:
        pad = ((0, 0), (0, b_pad - B), (0, d_pad - D))
        anchors = jnp.pad(anchors, pad)
        diags = jnp.pad(diags, pad)

    row_block = lambda c, t: (0, c * tiles_per_core + t, 0)
    slab_spec = pl.BlockSpec((4, block_rows, d_pad), row_block)

    # Explicit scoped-VMEM limit with headroom for the in-kernel f32 temps;
    # by construction this stays well under v7x's 64 MiB physical VMEM.
    vmem_bytes = 16 * block_rows * d_pad * itemsize + 48 * block_rows * d_pad
    vmem_limit = int(min(32 << 20, max(vmem_bytes + (2 << 20), 16 << 20)))

    # Hoisted: exp(temp) computed once, passed as an SMEM scalar.
    scale = jnp.exp(jnp.asarray(temp, jnp.float32)).reshape((1,))

    partials = pl.pallas_call(
        functools.partial(_nce_vsc_kernel, block_rows=block_rows,
                          tiles_per_core=tiles_per_core, batch=B),
        out_shape=jax.ShapeDtypeStruct((2, block_rows, 1), jnp.float32),
        grid=(2, tiles_per_core),
        in_specs=[pl.BlockSpec(memory_space=pltpu.SMEM),
                  slab_spec, slab_spec],
        out_specs=pl.BlockSpec((1, block_rows, 1), lambda c, t: (c, 0, 0)),
        compiler_params=pltpu.CompilerParams(
            dimension_semantics=("parallel", "arbitrary"),
            vmem_limit_bytes=vmem_limit),
    )(scale, anchors, diags)

    return jnp.sum(partials) / B


def _reference(temp, clip1, clip2, clip3, clip4):
    """Pure-JAX transcription of the PyTorch forward (for sanity checking)."""
    scale = jnp.exp(temp)
    hp = jax.lax.Precision.HIGHEST

    def diag(a, c):
        logits = jnp.einsum('bd,bkd->bk', a, scale * c, precision=hp)
        return jnp.diagonal(logits)[:, None]

    p11 = diag(clip1[0], clip1[1]); p22 = diag(clip2[0], clip2[1])
    p33 = diag(clip3[0], clip3[1]); p44 = diag(clip4[0], clip4[1])
    p12 = diag(clip1[0], clip2[1]); p14 = diag(clip1[0], clip4[1])
    p21 = diag(clip2[0], clip1[1]); p23 = diag(clip2[0], clip3[1])
    p32 = diag(clip3[0], clip3[1])  # module quirk: logits3_2 uses clip3[1]
    p34 = diag(clip3[0], clip4[1])
    p41 = diag(clip4[0], clip1[1]); p43 = diag(clip4[0], clip3[1])

    def ce(cols):
        row = jnp.concatenate(cols, axis=1)
        return jnp.mean(jax.nn.logsumexp(row, axis=1) - row[:, 0])

    return (ce([p11, p12, p14]) + ce([p22, p21, p23])
            + ce([p33, p32, p34]) + ce([p44, p41, p43]))


if __name__ == "__main__":
    B, D = 8, 32  # K == B (required by the eye-mask diagonal indexing)

    # Deterministic parameter init (module __init__: temp = log(1/0.07)).
    temp = jnp.asarray(math.log(1.0 / 0.07), dtype=jnp.float32)

    key = jax.random.PRNGKey(0)
    keys = jax.random.split(key, 8)
    clips = []
    for i in range(4):
        a = jax.random.normal(keys[2 * i], (B, D), dtype=jnp.float32)
        c = jax.random.normal(keys[2 * i + 1], (B, B, D), dtype=jnp.float32)
        clips.append((a, c))

    loss = nce_learnable_temp_loss_vsc(temp, *clips)
    loss = jax.block_until_ready(loss)

    ref = _reference(temp, *clips)
    assert jnp.allclose(loss, ref, rtol=1e-4, atol=1e-4), (loss, ref)

    print("KERNEL_OK")
</pallas_src>

<mosaic_0001>
module attributes {stable_mosaic.version = 11 : i64} {
  func.func @_nce_vsc_kernel(%arg0: i32, %arg1: i32, %arg2: memref<1xf32, #tpu.memory_space<smem>>, %arg3: memref<4x8x128xf32, #tpu.memory_space<vmem>>, %arg4: memref<4x8x128xf32, #tpu.memory_space<vmem>>, %arg5: memref<1x8x1xf32, #tpu.memory_space<vmem>>) attributes {dimension_semantics = [#tpu.dimension_semantics<parallel>, #tpu.dimension_semantics<arbitrary>], iteration_bounds = array<i64: 2, 1>, scalar_prefetch = 0 : i64, scratch_operands = 0 : i64, tpu.core_type = #tpu.core_type<tc>, window_params = [{transform_indices = @transform_0, window_bounds = array<i64: 1>}, {transform_indices = @transform_1, window_bounds = array<i64: 4, 8, 128>}, {transform_indices = @transform_2, window_bounds = array<i64: 4, 8, 128>}, {transform_indices = @transform_3, window_bounds = array<i64: 1, 8, 1>}]} {
    %c0_i32 = arith.constant 0 : i32
    %0 = arith.cmpi eq, %arg1, %c0_i32 : i32
    %1 = arith.extui %0 : i1 to i32
    %c0_i32_0 = arith.constant 0 : i32
    %2 = arith.cmpi ne, %1, %c0_i32_0 : i32
    scf.if %2 {
      %cst_65 = arith.constant 0.000000e+00 : f32
      %168 = vector.broadcast %cst_65 : f32 to vector<1x8x1xf32>
      %c0_66 = arith.constant 0 : index
      %c0_67 = arith.constant 0 : index
      %c0_68 = arith.constant 0 : index
      %169 = vector.load %arg5[%c0_66, %c0_67, %c0_68] : memref<1x8x1xf32, #tpu.memory_space<vmem>>, vector<1x8x1xf32>
      tpu.vector_store %arg5[%c0_66, %c0_67, %c0_68], %168 {strides = array<i32>} : memref<1x8x1xf32, #tpu.memory_space<vmem>>, vector<1x8x1xf32>,
    } else {
    }
    %c0 = arith.constant 0 : index
    %3 = memref.load %arg2[%c0] : memref<1xf32, #tpu.memory_space<smem>>
    %c1_i32 = arith.constant 1 : i32
    %4 = arith.muli %arg0, %c1_i32 : i32
    %5 = arith.addi %4, %arg1 : i32
    %c8_i32 = arith.constant 8 : i32
    %6 = arith.muli %5, %c8_i32 : i32
    %7 = tpu.iota {dimensions = array<i32: 0>} : vector<8x1xi32>
    %8 = vector.broadcast %6 : i32 to vector<8x1xi32>
    %9 = arith.addi %8, %7 : vector<8x1xi32>
    %c8_i32_1 = arith.constant 8 : i32
    %10 = vector.broadcast %c8_i32_1 : i32 to vector<8x1xi32>
    %11 = arith.cmpi slt, %9, %10 : vector<8x1xi32>
    %cst = arith.constant 0.000000e+00 : f32
    %12 = vector.broadcast %cst : f32 to vector<8x1xf32>
    %c0_2 = arith.constant 0 : index
    %c0_3 = arith.constant 0 : index
    %c0_4 = arith.constant 0 : index
    %13 = vector.load %arg3[%c0_2, %c0_3, %c0_4] : memref<4x8x128xf32, #tpu.memory_space<vmem>>, vector<1x8x128xf32>
    %14 = vector.shape_cast %13 : vector<1x8x128xf32> to vector<8x128xf32>
    %c0_5 = arith.constant 0 : index
    %c0_6 = arith.constant 0 : index
    %c0_7 = arith.constant 0 : index
    %15 = vector.load %arg4[%c0_5, %c0_6, %c0_7] : memref<4x8x128xf32, #tpu.memory_space<vmem>>, vector<1x8x128xf32>
    %16 = vector.shape_cast %15 : vector<1x8x128xf32> to vector<8x128xf32>
    %17 = arith.mulf %14, %16 : vector<8x128xf32>
    %cst_8 = arith.constant dense<0.000000e+00> : vector<8xf32>
    %18 = vector.multi_reduction <add>, %17, %cst_8 [1] : vector<8x128xf32> to vector<8xf32>
    %19 = vector.shape_cast %18 : vector<8xf32> to vector<8x1xf32>
    %20 = vector.broadcast %3 : f32 to vector<8x1xf32>
    %21 = arith.mulf %20, %19 : vector<8x1xf32>
    %c1 = arith.constant 1 : index
    %c0_9 = arith.constant 0 : index
    %c0_10 = arith.constant 0 : index
    %22 = vector.load %arg4[%c1, %c0_9, %c0_10] : memref<4x8x128xf32, #tpu.memory_space<vmem>>, vector<1x8x128xf32>
    %23 = vector.shape_cast %22 : vector<1x8x128xf32> to vector<8x128xf32>
    %24 = arith.mulf %14, %23 : vector<8x128xf32>
    %cst_11 = arith.constant dense<0.000000e+00> : vector<8xf32>
    %25 = vector.multi_reduction <add>, %24, %cst_11 [1] : vector<8x128xf32> to vector<8xf32>
    %26 = vector.shape_cast %25 : vector<8xf32> to vector<8x1xf32>
    %27 = vector.broadcast %3 : f32 to vector<8x1xf32>
    %28 = arith.mulf %27, %26 : vector<8x1xf32>
    %c3 = arith.constant 3 : index
    %c0_12 = arith.constant 0 : index
    %c0_13 = arith.constant 0 : index
    %29 = vector.load %arg4[%c3, %c0_12, %c0_13] : memref<4x8x128xf32, #tpu.memory_space<vmem>>, vector<1x8x128xf32>
    %30 = vector.shape_cast %29 : vector<1x8x128xf32> to vector<8x128xf32>
    %31 = arith.mulf %14, %30 : vector<8x128xf32>
    %cst_14 = arith.constant dense<0.000000e+00> : vector<8xf32>
    %32 = vector.multi_reduction <add>, %31, %cst_14 [1] : vector<8x128xf32> to vector<8xf32>
    %33 = vector.shape_cast %32 : vector<8xf32> to vector<8x1xf32>
    %34 = vector.broadcast %3 : f32 to vector<8x1xf32>
    %35 = arith.mulf %34, %33 : vector<8x1xf32>
    %36 = arith.maximumf %21, %28 : vector<8x1xf32>
    %37 = arith.maximumf %36, %35 : vector<8x1xf32>
    %38 = arith.subf %21, %37 : vector<8x1xf32>
    %39 = math.exp %38 : vector<8x1xf32>
    %40 = arith.subf %28, %37 : vector<8x1xf32>
    %41 = math.exp %40 : vector<8x1xf32>
    %42 = arith.addf %39, %41 : vector<8x1xf32>
    %43 = arith.subf %35, %37 : vector<8x1xf32>
    %44 = math.exp %43 : vector<8x1xf32>
    %45 = arith.addf %42, %44 : vector<8x1xf32>
    %46 = math.log %45 : vector<8x1xf32>
    %47 = arith.addf %37, %46 : vector<8x1xf32>
    %48 = arith.subf %47, %21 : vector<8x1xf32>
    %cst_15 = arith.constant 0.000000e+00 : f32
    %49 = vector.broadcast %cst_15 : f32 to vector<8x1xf32>
    %50 = arith.select %11, %48, %49 : vector<8x1xi1>, vector<8x1xf32>
    %51 = arith.addf %12, %50 : vector<8x1xf32>
    %c1_16 = arith.constant 1 : index
    %c0_17 = arith.constant 0 : index
    %c0_18 = arith.constant 0 : index
    %52 = vector.load %arg3[%c1_16, %c0_17, %c0_18] : memref<4x8x128xf32, #tpu.memory_space<vmem>>, vector<1x8x128xf32>
    %53 = vector.shape_cast %52 : vector<1x8x128xf32> to vector<8x128xf32>
    %c1_19 = arith.constant 1 : index
    %c0_20 = arith.constant 0 : index
    %c0_21 = arith.constant 0 : index
    %54 = vector.load %arg4[%c1_19, %c0_20, %c0_21] : memref<4x8x128xf32, #tpu.memory_space<vmem>>, vector<1x8x128xf32>
    %55 = vector.shape_cast %54 : vector<1x8x128xf32> to vector<8x128xf32>
    %56 = arith.mulf %53, %55 : vector<8x128xf32>
    %cst_22 = arith.constant dense<0.000000e+00> : vector<8xf32>
    %57 = vector.multi_reduction <add>, %56, %cst_22 [1] : vector<8x128xf32> to vector<8xf32>
    %58 = vector.shape_cast %57 : vector<8xf32> to vector<8x1xf32>
    %59 = vector.broadcast %3 : f32 to vector<8x1xf32>
    %60 = arith.mulf %59, %58 : vector<8x1xf32>
    %c0_23 = arith.constant 0 : index
    %c0_24 = arith.constant 0 : index
    %c0_25 = arith.constant 0 : index
    %61 = vector.load %arg4[%c0_23, %c0_24, %c0_25] : memref<4x8x128xf32, #tpu.memory_space<vmem>>, vector<1x8x128xf32>
    %62 = vector.shape_cast %61 : vector<1x8x128xf32> to vector<8x128xf32>
    %63 = arith.mulf %53, %62 : vector<8x128xf32>
    %cst_26 = arith.constant dense<0.000000e+00> : vector<8xf32>
    %64 = vector.multi_reduction <add>, %63, %cst_26 [1] : vector<8x128xf32> to vector<8xf32>
    %65 = vector.shape_cast %64 : vector<8xf32> to vector<8x1xf32>
    %66 = vector.broadcast %3 : f32 to vector<8x1xf32>
    %67 = arith.mulf %66, %65 : vector<8x1xf32>
    %c2 = arith.constant 2 : index
    %c0_27 = arith.constant 0 : index
    %c0_28 = arith.constant 0 : index
    %68 = vector.load %arg4[%c2, %c0_27, %c0_28] : memref<4x8x128xf32, #tpu.memory_space<vmem>>, vector<1x8x128xf32>
    %69 = vector.shape_cast %68 : vector<1x8x128xf32> to vector<8x128xf32>
    %70 = arith.mulf %53, %69 : vector<8x128xf32>
    %cst_29 = arith.constant dense<0.000000e+00> : vector<8xf32>
    %71 = vector.multi_reduction <add>, %70, %cst_29 [1] : vector<8x128xf32> to vector<8xf32>
    %72 = vector.shape_cast %71 : vector<8xf32> to vector<8x1xf32>
    %73 = vector.broadcast %3 : f32 to vector<8x1xf32>
    %74 = arith.mulf %73, %72 : vector<8x1xf32>
    %75 = arith.maximumf %60, %67 : vector<8x1xf32>
    %76 = arith.maximumf %75, %74 : vector<8x1xf32>
    %77 = arith.subf %60, %76 : vector<8x1xf32>
    %78 = math.exp %77 : vector<8x1xf32>
    %79 = arith.subf %67, %76 : vector<8x1xf32>
    %80 = math.exp %79 : vector<8x1xf32>
    %81 = arith.addf %78, %80 : vector<8x1xf32>
    %82 = arith.subf %74, %76 : vector<8x1xf32>
    %83 = math.exp %82 : vector<8x1xf32>
    %84 = arith.addf %81, %83 : vector<8x1xf32>
    %85 = math.log %84 : vector<8x1xf32>
    %86 = arith.addf %76, %85 : vector<8x1xf32>
    %87 = arith.subf %86, %60 : vector<8x1xf32>
    %cst_30 = arith.constant 0.000000e+00 : f32
    %88 = vector.broadcast %cst_30 : f32 to vector<8x1xf32>
    %89 = arith.select %11, %87, %88 : vector<8x1xi1>, vector<8x1xf32>
    %90 = arith.addf %51, %89 : vector<8x1xf32>
    %c2_31 = arith.constant 2 : index
    %c0_32 = arith.constant 0 : index
    %c0_33 = arith.constant 0 : index
    %91 = vector.load %arg3[%c2_31, %c0_32, %c0_33] : memref<4x8x128xf32, #tpu.memory_space<vmem>>, vector<1x8x128xf32>
    %92 = vector.shape_cast %91 : vector<1x8x128xf32> to vector<8x128xf32>
    %c2_34 = arith.constant 2 : index
    %c0_35 = arith.constant 0 : index
    %c0_36 = arith.constant 0 : index
    %93 = vector.load %arg4[%c2_34, %c0_35, %c0_36] : memref<4x8x128xf32, #tpu.memory_space<vmem>>, vector<1x8x128xf32>
    %94 = vector.shape_cast %93 : vector<1x8x128xf32> to vector<8x128xf32>
    %95 = arith.mulf %92, %94 : vector<8x128xf32>
    %cst_37 = arith.constant dense<0.000000e+00> : vector<8xf32>
    %96 = vector.multi_reduction <add>, %95, %cst_37 [1] : vector<8x128xf32> to vector<8xf32>
    %97 = vector.shape_cast %96 : vector<8xf32> to vector<8x1xf32>
    %98 = vector.broadcast %3 : f32 to vector<8x1xf32>
    %99 = arith.mulf %98, %97 : vector<8x1xf32>
    %c3_38 = arith.constant 3 : index
    %c0_39 = arith.constant 0 : index
    %c0_40 = arith.constant 0 : index
    %100 = vector.load %arg4[%c3_38, %c0_39, %c0_40] : memref<4x8x128xf32, #tpu.memory_space<vmem>>, vector<1x8x128xf32>
    %101 = vector.shape_cast %100 : vector<1x8x128xf32> to vector<8x128xf32>
    %102 = arith.mulf %92, %101 : vector<8x128xf32>
    %cst_41 = arith.constant dense<0.000000e+00> : vector<8xf32>
    %103 = vector.multi_reduction <add>, %102, %cst_41 [1] : vector<8x128xf32> to vector<8xf32>
    %104 = vector.shape_cast %103 : vector<8xf32> to vector<8x1xf32>
    %105 = vector.broadcast %3 : f32 to vector<8x1xf32>
    %106 = arith.mulf %105, %104 : vector<8x1xf32>
    %107 = arith.maximumf %99, %99 : vector<8x1xf32>
    %108 = arith.maximumf %107, %106 : vector<8x1xf32>
    %109 = arith.subf %99, %108 : vector<8x1xf32>
    %110 = math.exp %109 : vector<8x1xf32>
    %111 = arith.subf %99, %108 : vector<8x1xf32>
    %112 = math.exp %111 : vector<8x1xf32>
    %113 = arith.addf %110, %112 : vector<8x1xf32>
    %114 = arith.subf %106, %108 : vector<8x1xf32>
    %115 = math.exp %114 : vector<8x1xf32>
    %116 = arith.addf %113, %115 : vector<8x1xf32>
    %117 = math.log %116 : vector<8x1xf32>
    %118 = arith.addf %108, %117 : vector<8x1xf32>
    %119 = arith.subf %118, %99 : vector<8x1xf32>
    %cst_42 = arith.constant 0.000000e+00 : f32
    %120 = vector.broadcast %cst_42 : f32 to vector<8x1xf32>
    %121 = arith.select %11, %119, %120 : vector<8x1xi1>, vector<8x1xf32>
    %122 = arith.addf %90, %121 : vector<8x1xf32>
    %c3_43 = arith.constant 3 : index
    %c0_44 = arith.constant 0 : index
    %c0_45 = arith.constant 0 : index
    %123 = vector.load %arg3[%c3_43, %c0_44, %c0_45] : memref<4x8x128xf32, #tpu.memory_space<vmem>>, vector<1x8x128xf32>
    %124 = vector.shape_cast %123 : vector<1x8x128xf32> to vector<8x128xf32>
    %c3_46 = arith.constant 3 : index
    %c0_47 = arith.constant 0 : index
    %c0_48 = arith.constant 0 : index
    %125 = vector.load %arg4[%c3_46, %c0_47, %c0_48] : memref<4x8x128xf32, #tpu.memory_space<vmem>>, vector<1x8x128xf32>
    %126 = vector.shape_cast %125 : vector<1x8x128xf32> to vector<8x128xf32>
    %127 = arith.mulf %124, %126 : vector<8x128xf32>
    %cst_49 = arith.constant dense<0.000000e+00> : vector<8xf32>
    %128 = vector.multi_reduction <add>, %127, %cst_49 [1] : vector<8x128xf32> to vector<8xf32>
    %129 = vector.shape_cast %128 : vector<8xf32> to vector<8x1xf32>
    %130 = vector.broadcast %3 : f32 to vector<8x1xf32>
    %131 = arith.mulf %130, %129 : vector<8x1xf32>
    %c0_50 = arith.constant 0 : index
    %c0_51 = arith.constant 0 : index
    %c0_52 = arith.constant 0 : index
    %132 = vector.load %arg4[%c0_50, %c0_51, %c0_52] : memref<4x8x128xf32, #tpu.memory_space<vmem>>, vector<1x8x128xf32>
    %133 = vector.shape_cast %132 : vector<1x8x128xf32> to vector<8x128xf32>
    %134 = arith.mulf %124, %133 : vector<8x128xf32>
    %cst_53 = arith.constant dense<0.000000e+00> : vector<8xf32>
    %135 = vector.multi_reduction <add>, %134, %cst_53 [1] : vector<8x128xf32> to vector<8xf32>
    %136 = vector.shape_cast %135 : vector<8xf32> to vector<8x1xf32>
    %137 = vector.broadcast %3 : f32 to vector<8x1xf32>
    %138 = arith.mulf %137, %136 : vector<8x1xf32>
    %c2_54 = arith.constant 2 : index
    %c0_55 = arith.constant 0 : index
    %c0_56 = arith.constant 0 : index
    %139 = vector.load %arg4[%c2_54, %c0_55, %c0_56] : memref<4x8x128xf32, #tpu.memory_space<vmem>>, vector<1x8x128xf32>
    %140 = vector.shape_cast %139 : vector<1x8x128xf32> to vector<8x128xf32>
    %141 = arith.mulf %124, %140 : vector<8x128xf32>
    %cst_57 = arith.constant dense<0.000000e+00> : vector<8xf32>
    %142 = vector.multi_reduction <add>, %141, %cst_57 [1] : vector<8x128xf32> to vector<8xf32>
    %143 = vector.shape_cast %142 : vector<8xf32> to vector<8x1xf32>
    %144 = vector.broadcast %3 : f32 to vector<8x1xf32>
    %145 = arith.mulf %144, %143 : vector<8x1xf32>
    %146 = arith.maximumf %131, %138 : vector<8x1xf32>
    %147 = arith.maximumf %146, %145 : vector<8x1xf32>
    %148 = arith.subf %131, %147 : vector<8x1xf32>
    %149 = math.exp %148 : vector<8x1xf32>
    %150 = arith.subf %138, %147 : vector<8x1xf32>
    %151 = math.exp %150 : vector<8x1xf32>
    %152 = arith.addf %149, %151 : vector<8x1xf32>
    %153 = arith.subf %145, %147 : vector<8x1xf32>
    %154 = math.exp %153 : vector<8x1xf32>
    %155 = arith.addf %152, %154 : vector<8x1xf32>
    %156 = math.log %155 : vector<8x1xf32>
    %157 = arith.addf %147, %156 : vector<8x1xf32>
    %158 = arith.subf %157, %131 : vector<8x1xf32>
    %cst_58 = arith.constant 0.000000e+00 : f32
    %159 = vector.broadcast %cst_58 : f32 to vector<8x1xf32>
    %160 = arith.select %11, %158, %159 : vector<8x1xi1>, vector<8x1xf32>
    %161 = arith.addf %122, %160 : vector<8x1xf32>
    %c0_59 = arith.constant 0 : index
    %c0_60 = arith.constant 0 : index
    %c0_61 = arith.constant 0 : index
    %162 = vector.load %arg5[%c0_59, %c0_60, %c0_61] : memref<1x8x1xf32, #tpu.memory_space<vmem>>, vector<1x8x1xf32>
    %163 = vector.shape_cast %162 : vector<1x8x1xf32> to vector<8x1xf32>
    %164 = arith.addf %163, %161 : vector<8x1xf32>
    %c0_62 = arith.constant 0 : index
    %c0_63 = arith.constant 0 : index
    %c0_64 = arith.constant 0 : index
    %165 = vector.load %arg5[%c0_62, %c0_63, %c0_64] : memref<1x8x1xf32, #tpu.memory_space<vmem>>, vector<1x8x1xf32>
    %166 = vector.shape_cast %165 : vector<1x8x1xf32> to vector<8x1xf32>
    %167 = vector.shape_cast %164 : vector<8x1xf32> to vector<1x8x1xf32>
    tpu.vector_store %arg5[%c0_62, %c0_63, %c0_64], %167 {strides = array<i32>} : memref<1x8x1xf32, #tpu.memory_space<vmem>>, vector<1x8x1xf32>,
    return
  }
  func.func @transform_0(%arg0: i32, %arg1: i32) -> i32 {
    %c0_i32 = arith.constant 0 : i32
    %c0_i32_0 = arith.constant 0 : i32
    return %c0_i32 : i32
  }
  func.func @transform_1(%arg0: i32, %arg1: i32) -> (i32, i32, i32) {
    %c1_i32 = arith.constant 1 : i32
    %0 = arith.muli %arg0, %c1_i32 : i32
    %1 = arith.addi %0, %arg1 : i32
    %c0_i32 = arith.constant 0 : i32
    %c0_i32_0 = arith.constant 0 : i32
    %c0_i32_1 = arith.constant 0 : i32
    return %c0_i32, %1, %c0_i32_0 : i32, i32, i32
  }
  func.func @transform_2(%arg0: i32, %arg1: i32) -> (i32, i32, i32) {
    %c1_i32 = arith.constant 1 : i32
    %0 = arith.muli %arg0, %c1_i32 : i32
    %1 = arith.addi %0, %arg1 : i32
    %c0_i32 = arith.constant 0 : i32
    %c0_i32_0 = arith.constant 0 : i32
    %c0_i32_1 = arith.constant 0 : i32
    return %c0_i32, %1, %c0_i32_0 : i32, i32, i32
  }
  func.func @transform_3(%arg0: i32, %arg1: i32) -> (i32, i32, i32) {
    %c0_i32 = arith.constant 0 : i32
    %c0_i32_0 = arith.constant 0 : i32
    %c0_i32_1 = arith.constant 0 : i32
    return %arg0, %c0_i32, %c0_i32_0 : i32, i32, i32
  }
}

</mosaic_0001>

<llo_original>
// kernel: tpu_custom_call.1
$region0: #{tpu_custom_call.1}
  #allocation0 [shape = 'u32[]', space=smem, size = 0x4, offset = 0x4, fixed_abs, tag = 'smem constant byte address 0x4 - core index']
  #allocation1 [shape = 'u32[72,128]{1,0:T(1,128)}', space=vmem, size = 0x9000, scoped, tag = 'internal scratch']
  #allocation2 [shape = 'f32[1]{0:T(128)S(6)}', space=smem, size = 0x200, scoped, tag = 'scoped memory for tpu_custom_call.1']
  %s0 = inlined_call_operand.<no memory space> [shape: f32[1], index: 0, kind: input, shape index: {}]
  %s1 = inlined_call_operand.hbm [shape: f32[4,16,128], index: 1, kind: input, shape index: {}]
  %s2 = inlined_call_operand.hbm [shape: f32[4,16,128], index: 2, kind: input, shape index: {}]
  %s3 = inlined_call_operand.vmem [shape: f32[2,8,1], index: 3, kind: output, shape index: {}]
  %s4 = sld [smem:[#allocation0]]
  $region57: #{tpu_custom_call.1} parent=0
    _
  %s6 = ssub.s32 1, %s4
  %s7 = scalar_select 0, %s6, %s4
  %8 = sst [smem:[#allocation2]] %s0
  $region1: #{tpu_custom_call.1} parent=0
    #allocation3 [shape = 'u8[32768]{0}', space=vmem, size = 0x8000, scoped, tag = 'input window, operand 1']
    #allocation4 [shape = 's32[2]{0}', space=sflag, size = 0x8, scoped, tag = 'scoped memory for tpu_custom_call.1']
    #allocation5 [shape = 'u8[32768]{0}', space=vmem, size = 0x8000, scoped, tag = 'input window, operand 2']
    #allocation6 [shape = 's32[2]{0}', space=sflag, size = 0x8, scoped, tag = 'scoped memory for tpu_custom_call.1']
    %9 = vsyncpa [#allocation4], 0
    %s10 = scalar_lea.sflag [#allocation4], 1
    %11 = vsyncpa %s10, 0
    %12 = vsyncpa [#allocation6], 0
    %s13 = scalar_lea.sflag [#allocation6], 1
    %14 = vsyncpa %s13, 0
    loop: start=0, step=1, limit=4
    $region2: #{tpu_custom_call.1} parent=1 // loop_pre_header
      _
    $region3: #{tpu_custom_call.1} parent=1 // loop_header
      %s16 = sphi 0, %s20
      %p17 = scmp.ge.s32.totalorder %s16, 4
      %s23 = sphi 0, %s35
      %s24 = sphi 0, %s31
      %s25 = sphi 0, %s23
      %s26 = sphi 0, %s24
      %s27 = sphi 0, %s25
      %s28 = sphi 0, %s26
      %s36 = sphi 0, %s36
      %s38 = sphi 0, %s36
      %s39 = sphi 0, %s38
      %s53 = sphi 0, %s39
      %s61 = sphi 0, %s63
      %s64 = sphi 0, %s61
      %s65 = sphi 0, %s64
      %s81 = sphi 0, %s65
      %s89 = sphi 0, %s91
      %s92 = sphi 0, %s89
      %s93 = sphi 0, %s92
      %s109 = sphi 0, %s93
      %s115 = sphi 0, %s117
      %s118 = sphi 0, %s115
      %s119 = sphi 0, %s118
      %s135 = sphi 0, %s119
    $region4: #{tpu_custom_call.1} parent=1 // loop_header_branch
      %19 = sbr.rel (%p17) target = $region8
    $region5: #{tpu_custom_call.1} parent=1 // loop_body
      %s21 = ssub.s32 %s16, 1
      %s22 = ssub.s32 %s16, 2
      %s29 = sadd.s32 1, %s24
      %p30 = scmp.ge.s32.totalorder %s29, 1
      %s31 = scalar_select %p30, 0, %s29
      %s32 = sadd.s32 1, %s23
      %s33 = scalar_select %p30, %s32, %s23
      %p34 = scmp.ge.s32.totalorder %s33, 2
      %s35 = scalar_select %p34, 0, %s33
      %s37 = sadd.s32 %s36, 1
      %p40 = scmp.eq.s32.totalorder %s16, 1
      %p41 = scmp.ne.s32.totalorder %s36, %s38
      %p42 = scmp.eq.s32.totalorder %s16, 0
      %p43 = por %p41, %p42
      %p44 = scmp.ne.s32.totalorder %s36, %s38
      %p45 = scmp.eq.s32.totalorder %s21, 1
      %p46 = por %p44, %p45
      %p47 = scmp.ne.s32.totalorder %s38, %s39
      %p48 = scmp.eq.s32.totalorder %s21, 0
      %p49 = por %p47, %p48
      %p50 = scmp.ne.s32.totalorder %s38, %s39
      %p51 = scmp.eq.s32.totalorder %s22, 1
      %p52 = por %p50, %p51
      %p54 = scmp.ne.s32.totalorder %s39, %s53
      %p55 = scmp.eq.s32.totalorder %s22, 0
      %p56 = por %p54, %p55
      %s57 = sadd.s32 %s23, %s24
      %s58 = sadd.s32 %s35, %s31
      %s59 = ssub.s32 %s57, %s58
      %p60 = scmp.eq.s32.totalorder %s59, 0
      %s62 = sadd.s32 %s61, 1
      %s63 = scalar_select %p60, %s61, %s62
      %p66 = pneg %p60
      %p67 = scmp.eq.s32.totalorder %s16, 1
      %p68 = por %p66, %p67
      %p69 = scmp.ne.s32.totalorder %s61, %s64
      %p70 = scmp.eq.s32.totalorder %s16, 0
      %p71 = por %p69, %p70
      %p72 = scmp.ne.s32.totalorder %s61, %s64
      %p73 = scmp.eq.s32.totalorder %s21, 1
      %p74 = por %p72, %p73
      %p75 = scmp.ne.s32.totalorder %s64, %s65
      %p76 = scmp.eq.s32.totalorder %s21, 0
      %p77 = por %p75, %p76
      %p78 = scmp.ne.s32.totalorder %s64, %s65
      %p79 = scmp.eq.s32.totalorder %s22, 1
      %p80 = por %p78, %p79
      %p82 = scmp.ne.s32.totalorder %s65, %s81
      %p83 = scmp.eq.s32.totalorder %s22, 0
      %p84 = por %p82, %p83
      %s85 = sadd.s32 %s23, %s24
      %s86 = sadd.s32 %s35, %s31
      %s87 = ssub.s32 %s85, %s86
      %p88 = scmp.eq.s32.totalorder %s87, 0
      %s90 = sadd.s32 %s89, 1
      %s91 = scalar_select %p88, %s89, %s90
      %p94 = pneg %p88
      %p95 = scmp.eq.s32.totalorder %s16, 1
      %p96 = por %p94, %p95
      %p97 = scmp.ne.s32.totalorder %s89, %s92
      %p98 = scmp.eq.s32.totalorder %s16, 0
      %p99 = por %p97, %p98
      %p100 = scmp.ne.s32.totalorder %s89, %s92
      %p101 = scmp.eq.s32.totalorder %s21, 1
      %p102 = por %p100, %p101
      %p103 = scmp.ne.s32.totalorder %s92, %s93
      %p104 = scmp.eq.s32.totalorder %s21, 0
      %p105 = por %p103, %p104
      %p106 = scmp.ne.s32.totalorder %s92, %s93
      %p107 = scmp.eq.s32.totalorder %s22, 1
      %p108 = por %p106, %p107
      %p110 = scmp.ne.s32.totalorder %s93, %s109
      %p111 = scmp.eq.s32.totalorder %s22, 0
      %p112 = por %p110, %p111
      %s113 = ssub.s32 %s23, %s35
      %p114 = scmp.eq.s32.totalorder %s113, 0
      %s116 = sadd.s32 %s115, 1
      %s117 = scalar_select %p114, %s115, %s116
      %p120 = pneg %p114
      %p121 = scmp.eq.s32.totalorder %s16, 1
      %p122 = por %p120, %p121
      %p123 = scmp.ne.s32.totalorder %s115, %s118
      %p124 = scmp.eq.s32.totalorder %s16, 0
      %p125 = por %p123, %p124
      %p126 = scmp.ne.s32.totalorder %s115, %s118
      %p127 = scmp.eq.s32.totalorder %s21, 1
      %p128 = por %p126, %p127
      %p129 = scmp.ne.s32.totalorder %s118, %s119
      %p130 = scmp.eq.s32.totalorder %s21, 0
      %p131 = por %p129, %p130
      %p132 = scmp.ne.s32.totalorder %s118, %s119
      %p133 = scmp.eq.s32.totalorder %s22, 1
      %p134 = por %p132, %p133
      %p136 = scmp.ne.s32.totalorder %s119, %s135
      %p137 = scmp.eq.s32.totalorder %s22, 0
      %p138 = por %p136, %p137
      %p139 = scmp.le.s32.totalorder 1, %s16
      %p140 = scmp.lt.s32.totalorder %s16, 3
      %p141 = pnand %p139, %p140
      %p142 = pneg %p141
      // Predicated region
      $region9: #{tpu_custom_call.1} parent=5 // pred_check
        _
      $region10: #{tpu_custom_call.1} parent=5 // pred_check_branch
        %144 = sbr.rel (%p141) target = $region12
      $region11: #{tpu_custom_call.1} parent=5 // pred_region
        %s145 = ssub.s32 %s16, 1
        // Predicated region
        $region13: #{tpu_custom_call.1} parent=11 // pred_check
          %p146 = pneg %p49
        $region14: #{tpu_custom_call.1} parent=11 // pred_check_branch
          %148 = sbr.rel (%p146) target = $region16
        $region15: #{tpu_custom_call.1} parent=11 // pred_region
          _
        $region16: #{tpu_custom_call.1} parent=11 // pred_fallthru
          _
      $region12: #{tpu_custom_call.1} parent=5 // pred_fallthru
        _
      %p149 = scmp.lt.s32.totalorder %s16, 2
      // Predicated region
      $region17: #{tpu_custom_call.1} parent=5 // pred_check
        %p150 = pneg %p149
      $region18: #{tpu_custom_call.1} parent=5 // pred_check_branch
        %152 = sbr.rel (%p150) target = $region20
      $region19: #{tpu_custom_call.1} parent=5 // pred_region
        // Predicated region
        $region21: #{tpu_custom_call.1} parent=19 // pred_check
          %p153 = pneg %p71
        $region22: #{tpu_custom_call.1} parent=19 // pred_check_branch
          %155 = sbr.rel (%p153) target = $region24
        $region23: #{tpu_custom_call.1} parent=19 // pred_region
          %s156 = sand.u32 %s61, 1
          %s157 = scalar_lea.sflag [#allocation4], %s156
          %s158 = sand.u32 %s61, 1
          %s159 = smul.addr %s158, 32
          %s160 = scalar_lea.vmem [#allocation3], %s159
          %s161 = sadd.s32 %s23, %s24
          %163 = vsyncadd %s157, 0
          %s164 = smul.addr %s161, 8
          %s165 = scalar_lea.hbm %s1, %s164
          %s166 = sshll.u32 %s165, 4
          %s167 = int_to_ptr.hbm [resolvable:$true] %s166
          %s168 = sshll.u32 %s160, 4
          %s169 = int_to_ptr.vmem [resolvable:$true] %s168
          %174 = dma.hbm_to_vmem [thread:$0]  %s167, 512, %s169, %s157, 256, 128, 8
        $region24: #{tpu_custom_call.1} parent=19 // pred_fallthru
          _
        // Predicated region
        $region25: #{tpu_custom_call.1} parent=19 // pred_check
          %p175 = pneg %p99
        $region26: #{tpu_custom_call.1} parent=19 // pred_check_branch
          %177 = sbr.rel (%p175) target = $region28
        $region27: #{tpu_custom_call.1} parent=19 // pred_region
          %s178 = sand.u32 %s89, 1
          %s179 = scalar_lea.sflag [#allocation6], %s178
          %s180 = sand.u32 %s89, 1
          %s181 = smul.addr %s180, 32
          %s182 = scalar_lea.vmem [#allocation5], %s181
          %s183 = sadd.s32 %s23, %s24
          %185 = vsyncadd %s179, 0
          %s186 = smul.addr %s183, 8
          %s187 = scalar_lea.hbm %s2, %s186
          %s188 = sshll.u32 %s187, 4
          %s189 = int_to_ptr.hbm [resolvable:$true] %s188
          %s190 = sshll.u32 %s182, 4
          %s191 = int_to_ptr.vmem [resolvable:$true] %s190
          %196 = dma.hbm_to_vmem [thread:$0]  %s189, 512, %s191, %s179, 256, 128, 8
        $region28: #{tpu_custom_call.1} parent=19 // pred_fallthru
          _
      $region20: #{tpu_custom_call.1} parent=5 // pred_fallthru
        _
      %p197 = scmp.le.s32.totalorder 1, %s16
      %p198 = scmp.lt.s32.totalorder %s16, 3
      %p199 = pnand %p197, %p198
      %p200 = pneg %p199
      // Predicated region
      $region29: #{tpu_custom_call.1} parent=5 // pred_check
        _
      $region30: #{tpu_custom_call.1} parent=5 // pred_check_branch
        %202 = sbr.rel (%p199) target = $region32
      $region31: #{tpu_custom_call.1} parent=5 // pred_region
        %s203 = ssub.s32 %s16, 1
        %s204 = sand.u32 %s64, 1
        %s205 = scalar_lea.sflag [#allocation4], %s204
        %s206 = sand.u32 %s64, 1
        %s207 = smul.addr %s206, 32
        %s208 = scalar_lea.vmem [#allocation3], %s207
        // Predicated region
        $region33: #{tpu_custom_call.1} parent=31 // pred_check
          %p209 = pneg %p77
        $region34: #{tpu_custom_call.1} parent=31 // pred_check_branch
          %211 = sbr.rel (%p209) target = $region36
        $region35: #{tpu_custom_call.1} parent=31 // pred_region
          %213 = dma.done %s205, 512
        $region36: #{tpu_custom_call.1} parent=31 // pred_fallthru
          _
        %s214 = sand.u32 %s92, 1
        %s215 = scalar_lea.sflag [#allocation6], %s214
        %s216 = sand.u32 %s92, 1
        %s217 = smul.addr %s216, 32
        %s218 = scalar_lea.vmem [#allocation5], %s217
        // Predicated region
        $region37: #{tpu_custom_call.1} parent=31 // pred_check
          %p219 = pneg %p105
        $region38: #{tpu_custom_call.1} parent=31 // pred_check_branch
          %221 = sbr.rel (%p219) target = $region40
        $region39: #{tpu_custom_call.1} parent=31 // pred_region
          %223 = dma.done %s215, 512
        $region40: #{tpu_custom_call.1} parent=31 // pred_fallthru
          _
        %p224 = pneg %p49
        %p225 = pneg %p46
        %s226 = sand.u32 %s64, 1
        %s227 = scalar_lea.sflag [#allocation4], %s226
        %s228 = sand.u32 %s64, 1
        %s229 = smul.addr %s228, 32
        %s230 = scalar_lea.vmem [#allocation3], %s229
        %p231 = pneg %p77
        %p232 = pneg %p74
        %s233 = sand.u32 %s92, 1
        %s234 = scalar_lea.sflag [#allocation6], %s233
        %s235 = sand.u32 %s92, 1
        %s236 = smul.addr %s235, 32
        %s237 = scalar_lea.vmem [#allocation5], %s236
        %p238 = pneg %p105
        %p239 = pneg %p102
        %p240 = pneg %p131
        %p241 = pneg %p128
        %p242 = scmp.lt.s32.totalorder %s25, 1
        %s243 = scalar_select %p242, %s25, 1
        %s244 = smul.addr %s243, 8
        %s245 = scalar_lea.vmem %s3, %s244
        %s246 = sadd.s32 %s25, %s26
        %s247 = sadd.s32 %s25, %s26
        %p248 = scmp.lt.s32.totalorder %s25, 1
        %s249 = scalar_select %p248, %s25, 1
        %s250 = smul.addr %s249, 8
        %s251 = scalar_lea.vmem %s3, %s250
        %p252 = scmp.eq.s32.totalorder %s26, 0
        // Predicated region
        $region41: #{tpu_custom_call.1} parent=31 // pred_check
          %p253 = pneg %p252
        $region42: #{tpu_custom_call.1} parent=31 // pred_check_branch
          %255 = sbr.rel (%p253) target = $region44
        $region43: #{tpu_custom_call.1} parent=31 // pred_region
          %vm256 = vcmask 7168
          %257 = vst.msk [vmem:[%s251] sm:$0xff] %vm256, 0.0
        $region44: #{tpu_custom_call.1} parent=31 // pred_fallthru
          _
        %s258 = sld [smem:[#allocation2]]
        %s259 = sadd.s32 %s25, %s26
        %s260 = smul.u32 %s259, 8
        %v261 = vlaneseq
        %v262 = vshrl.u32 %v261, 7
        %v263 = vstv %s260
        %v264 = vadd.s32 %v263, %v262
        %vm265 = vcmp.lt.s32.totalorder %v264, 8
        %v266 = vld [vmem:[%s208] sm:$0xff]
        %v267 = vld [vmem:[%s218] sm:$0xff]
        %v268 = vmul.f32 %v266, %v267
        %269 = vadd.xlane.f32.xlu0 %v268
        %v270 = vpop.xlane.xlu0 %269
        %v271 = vstv %s258
        %v272 = vmul.f32 %v271, %v270
        %s273 = scalar_lea.vmem %s218, 8 [#allocation5]
        %v274 = vld [vmem:[%s273] sm:$0xff]
        %v275 = vmul.f32 %v266, %v274
        %276 = vadd.xlane.f32.xlu0 %v275
        %v277 = vpop.xlane.xlu0 %276
        %v278 = vmul.f32 %v271, %v277
        %s279 = scalar_lea.vmem %s218, 24 [#allocation5]
        %v280 = vld [vmem:[%s279] sm:$0xff]
        %v281 = vmul.f32 %v266, %v280
        %282 = vadd.xlane.f32.xlu0 %v281
        %v283 = vpop.xlane.xlu0 %282
        %v284 = vmul.f32 %v271, %v283
        %v285 = vmax.f32 %v272, %v278
        %v286 = vmax.f32 %v285, %v284
        %v287 = vsub.f32 %v272, %v286
        %v288 = vmul.f32 %v287, 1.442695
        %v289 = vpow.pop %v288
        %v290 = vsub.f32 %v278, %v286
        %v291 = vmul.f32 %v290, 1.442695
        %v292 = vpow.pop %v291
        %v293 = vadd.f32 %v289, %v292
        %v294 = vsub.f32 %v284, %v286
        %v295 = vmul.f32 %v294, 1.442695
        %v296 = vpow.pop %v295
        %v297 = vadd.f32 %v293, %v296
        %v298 = vlog2.pop %v297
        %v299 = vmul.f32 %v298, 0.6931472
        %v300 = vadd.f32 %v286, %v299
        %v301 = vsub.f32 %v300, %v272
        %v302 = vsel %vm265, %v301, 0.0
        %v303 = vadd.f32 %v302, 0.0
        %s304 = scalar_lea.vmem %s208, 8 [#allocation3]
        %v305 = vld [vmem:[%s304] sm:$0xff]
        %v306 = vmul.f32 %v305, %v274
        %307 = vadd.xlane.f32.xlu0 %v306
        %v308 = vpop.xlane.xlu0 %307
        %v309 = vmul.f32 %v271, %v308
        %v310 = vmul.f32 %v305, %v267
        %311 = vadd.xlane.f32.xlu0 %v310
        %v312 = vpop.xlane.xlu0 %311
        %v313 = vmul.f32 %v271, %v312
        %s314 = scalar_lea.vmem %s218, 16 [#allocation5]
        %v315 = vld [vmem:[%s314] sm:$0xff]
        %v316 = vmul.f32 %v305, %v315
        %317 = vadd.xlane.f32.xlu0 %v316
        %v318 = vpop.xlane.xlu0 %317
        %v319 = vmul.f32 %v271, %v318
        %v320 = vmax.f32 %v309, %v313
        %v321 = vmax.f32 %v320, %v319
        %v322 = vsub.f32 %v309, %v321
        %v323 = vmul.f32 %v322, 1.442695
        %v324 = vpow.pop %v323
        %v325 = vsub.f32 %v313, %v321
        %v326 = vmul.f32 %v325, 1.442695
        %v327 = vpow.pop %v326
        %v328 = vadd.f32 %v324, %v327
        %v329 = vsub.f32 %v319, %v321
        %v330 = vmul.f32 %v329, 1.442695
        %v331 = vpow.pop %v330
        %v332 = vadd.f32 %v328, %v331
        %v333 = vlog2.pop %v332
        %v334 = vmul.f32 %v333, 0.6931472
        %v335 = vadd.f32 %v321, %v334
        %v336 = vsub.f32 %v335, %v309
        %v337 = vsel %vm265, %v336, 0.0
        %v338 = vadd.f32 %v303, %v337
        %s339 = scalar_lea.vmem %s208, 16 [#allocation3]
        %v340 = vld [vmem:[%s339] sm:$0xff]
        %v341 = vmul.f32 %v340, %v315
        %342 = vadd.xlane.f32.xlu0 %v341
        %v343 = vpop.xlane.xlu0 %342
        %v344 = vmul.f32 %v271, %v343
        %v345 = vmul.f32 %v340, %v280
        %346 = vadd.xlane.f32.xlu0 %v345
        %v347 = vpop.xlane.xlu0 %346
        %v348 = vmul.f32 %v271, %v347
        %v349 = vmax.f32 %v344, %v348
        %v350 = vsub.f32 %v344, %v349
        %v351 = vmul.f32 %v350, 1.442695
        %v352 = vpow.pop %v351
        %v353 = vadd.f32 %v352, %v352
        %v354 = vsub.f32 %v348, %v349
        %v355 = vmul.f32 %v354, 1.442695
        %v356 = vpow.pop %v355
        %v357 = vadd.f32 %v353, %v356
        %v358 = vlog2.pop %v357
        %v359 = vmul.f32 %v358, 0.6931472
        %v360 = vadd.f32 %v349, %v359
        %v361 = vsub.f32 %v360, %v344
        %v362 = vsel %vm265, %v361, 0.0
        %v363 = vadd.f32 %v338, %v362
        %s364 = scalar_lea.vmem %s208, 24 [#allocation3]
        %v365 = vld [vmem:[%s364] sm:$0xff]
        %v366 = vmul.f32 %v365, %v280
        %367 = vadd.xlane.f32.xlu0 %v366
        %v368 = vpop.xlane.xlu0 %367
        %v369 = vmul.f32 %v271, %v368
        %v370 = vmul.f32 %v365, %v267
        %371 = vadd.xlane.f32.xlu0 %v370
        %v372 = vpop.xlane.xlu0 %371
        %v373 = vmul.f32 %v271, %v372
        %v374 = vmul.f32 %v365, %v315
        %375 = vadd.xlane.f32.xlu0 %v374
        %v376 = vpop.xlane.xlu0 %375
        %v377 = vmul.f32 %v271, %v376
        %v378 = vmax.f32 %v369, %v373
        %v379 = vmax.f32 %v378, %v377
        %v380 = vsub.f32 %v369, %v379
        %v381 = vmul.f32 %v380, 1.442695
        %v382 = vpow.pop %v381
        %v383 = vsub.f32 %v373, %v379
        %v384 = vmul.f32 %v383, 1.442695
        %v385 = vpow.pop %v384
        %v386 = vadd.f32 %v382, %v385
        %v387 = vsub.f32 %v377, %v379
        %v388 = vmul.f32 %v387, 1.442695
        %v389 = vpow.pop %v388
        %v390 = vadd.f32 %v386, %v389
        %v391 = vlog2.pop %v390
        %v392 = vmul.f32 %v391, 0.6931472
        %v393 = vadd.f32 %v379, %v392
        %v394 = vsub.f32 %v393, %v369
        %v395 = vsel %vm265, %v394, 0.0
        %v396 = vadd.f32 %v363, %v395
        %v397 = vld [vmem:[%s251] sm:$0xff]
        %v398 = vadd.f32 %v397, %v396
        %vm399 = vcmask 7168
        %400 = vst.msk [vmem:[%s251] sm:$0xff] %vm399, %v398
        %p401 = scmp.lt.s32.totalorder %s25, 1
        %s402 = scalar_select %p401, %s25, 1
        %s403 = smul.addr %s402, 8
        %s404 = scalar_lea.vmem %s3, %s403
        // Predicated region
        $region45: #{tpu_custom_call.1} parent=31 // pred_check
          %p405 = pneg %p128
        $region46: #{tpu_custom_call.1} parent=31 // pred_check_branch
          %407 = sbr.rel (%p405) target = $region48
        $region47: #{tpu_custom_call.1} parent=31 // pred_region
          _
        $region48: #{tpu_custom_call.1} parent=31 // pred_fallthru
          _
      $region32: #{tpu_custom_call.1} parent=5 // pred_fallthru
        _
      %p408 = scmp.le.s32.totalorder 2, %s16
      // Predicated region
      $region49: #{tpu_custom_call.1} parent=5 // pred_check
        %p409 = pneg %p408
      $region50: #{tpu_custom_call.1} parent=5 // pred_check_branch
        %411 = sbr.rel (%p409) target = $region52
      $region51: #{tpu_custom_call.1} parent=5 // pred_region
        %s412 = ssub.s32 %s16, 2
        // Predicated region
        $region53: #{tpu_custom_call.1} parent=51 // pred_check
          %p413 = pneg %p134
        $region54: #{tpu_custom_call.1} parent=51 // pred_check_branch
          %415 = sbr.rel (%p413) target = $region56
        $region55: #{tpu_custom_call.1} parent=51 // pred_region
          %p416 = scmp.lt.s32.totalorder %s27, 1
          %s417 = scalar_select %p416, %s27, 1
          %s418 = smul.addr %s417, 8
          %s419 = scalar_lea.vmem %s3, %s418
        $region56: #{tpu_custom_call.1} parent=51 // pred_fallthru
          _
      $region52: #{tpu_custom_call.1} parent=5 // pred_fallthru
        _
    $region6: #{tpu_custom_call.1} parent=1 // loop_footer
      %s20 = sadd.s32 1, %s16
    $region7: #{tpu_custom_call.1} parent=1 // loop_footer_branch
      %15 = sbr.rel target = $region3
    $region8: #{tpu_custom_call.1} parent=1 // loop_exit
      _
    %420 = vsyncpa [#allocation4], 1
    %s421 = scalar_lea.sflag [#allocation4], 1
    %422 = vsyncpa %s421, 1
    %423 = vsyncpa [#allocation6], 1
    %s424 = scalar_lea.sflag [#allocation6], 1
    %425 = vsyncpa %s424, 1

</llo_original>
